<compile_context>
chip_gen: v7x
topology: tpu7x:2x2x1
jax: 0.10.0
libtpu: 0.0.40
codegen_flags: <defaults>
</compile_context>

<pallas_src>
import jax
import jax.numpy as jnp
from jax.experimental import pallas as pl
from jax.experimental.pallas import tpu as pltpu

HIDDEN = 50   # fixed by the PyTorch module definition
LANE = 128    # TPU lane width


def _round_up(n, m):
    return ((n + m - 1) // m) * m


# ---------------------------------------------------------------------------
# Kernel
# ---------------------------------------------------------------------------
def _make_policy_kernel(valid_actions, compute_dtype):
    """3x tanh-Linear + output Linear, plus masked softmax over valid lanes."""

    def kernel(x_ref, w1_ref, b1_ref, w2_ref, b2_ref, w3_ref, b3_ref,
               w4_ref, b4_ref, logits_ref, probs_ref):
        x = x_ref[...].astype(compute_dtype)

        # net = Linear -> Tanh -> Linear -> Tanh -> Linear -> Tanh -> Linear
        h = jnp.tanh(jnp.dot(x, w1_ref[...],
                             preferred_element_type=jnp.float32) + b1_ref[...])
        h = jnp.tanh(jnp.dot(h.astype(compute_dtype), w2_ref[...],
                             preferred_element_type=jnp.float32) + b2_ref[...])
        h = jnp.tanh(jnp.dot(h.astype(compute_dtype), w3_ref[...],
                             preferred_element_type=jnp.float32) + b3_ref[...])
        logits = (jnp.dot(h.astype(compute_dtype), w4_ref[...],
                          preferred_element_type=jnp.float32) + b4_ref[...])
        logits_ref[...] = logits                      # mean for the continuous head

        # Discrete head: softmax over the valid (un-padded) action columns.
        col = jax.lax.broadcasted_iota(jnp.int32, logits.shape, 1)
        valid = col < valid_actions
        masked = jnp.where(valid, logits, -jnp.inf)
        m = jnp.max(masked, axis=-1, keepdims=True)
        e = jnp.where(valid, jnp.exp(masked - m), 0.0)
        denom = jnp.sum(e, axis=-1, keepdims=True)
        probs_ref[...] = e * pl.reciprocal(denom, approx=True)

    return kernel


# ---------------------------------------------------------------------------
# Wrapper
# ---------------------------------------------------------------------------
def policy_forward_pallas(states, padded_params, action_dim, *,
                          block_b=256, use_bf16=False):
    """Returns (mean/logits, probs), both shaped (B, action_dim)."""
    B, S = states.shape
    h_pad = padded_params["w1"].shape[1]
    a_pad = padded_params["w4"].shape[1]

    # Batch tile: multiple of 8 sublanes, capped so VMEM stays comfortably
    # under the v7x budget (64 MiB physical / 32 MiB scoped default).
    tb = min(int(block_b), _round_up(B, 8))
    tb = _round_up(tb, 8)
    b_pad = _round_up(B, tb)
    if b_pad != B:
        states = jnp.pad(states, ((0, b_pad - B), (0, 0)))

    compute_dtype = jnp.bfloat16 if use_bf16 else jnp.float32
    w1 = padded_params["w1"].astype(compute_dtype)
    w2 = padded_params["w2"].astype(compute_dtype)
    w3 = padded_params["w3"].astype(compute_dtype)
    w4 = padded_params["w4"].astype(compute_dtype)
    b1, b2, b3, b4 = (padded_params[k] for k in ("b1", "b2", "b3", "b4"))

    grid = (b_pad // tb,)

    def const_spec(arr):
        return pl.BlockSpec(arr.shape, lambda i: (0, 0))

    in_specs = [pl.BlockSpec((tb, S), lambda i: (i, 0)),
                const_spec(w1), const_spec(b1),
                const_spec(w2), const_spec(b2),
                const_spec(w3), const_spec(b3),
                const_spec(w4), const_spec(b4)]
    out_specs = (pl.BlockSpec((tb, a_pad), lambda i: (i, 0)),
                 pl.BlockSpec((tb, a_pad), lambda i: (i, 0)))
    out_shape = (jax.ShapeDtypeStruct((b_pad, a_pad), jnp.float32),
                 jax.ShapeDtypeStruct((b_pad, a_pad), jnp.float32))

    weight_bytes = sum(int(a.size) * a.dtype.itemsize
                       for a in (w1, b1, w2, b2, w3, b3, w4, b4))
    cost = pl.CostEstimate(
        flops=2 * b_pad * (S * h_pad + 2 * h_pad * h_pad + h_pad * a_pad),
        transcendentals=b_pad * (3 * h_pad + a_pad + 1),
        bytes_accessed=(b_pad * S * states.dtype.itemsize + weight_bytes
                        + 2 * b_pad * a_pad * 4),
    )

    kernel = _make_policy_kernel(action_dim, compute_dtype)

    logits, probs = pl.pallas_call(
        kernel,
        grid=grid,
        in_specs=in_specs,
        out_specs=out_specs,
        out_shape=out_shape,
        compiler_params=pltpu.CompilerParams(
            dimension_semantics=("parallel",),
            vmem_limit_bytes=32 * 1024 * 1024),
        cost_estimate=cost,
    )(states, w1, b1, w2, b2, w3, b3, w4, b4)

    return logits[:B, :action_dim], probs[:B, :action_dim]


# ---------------------------------------------------------------------------
# Parameters
# ---------------------------------------------------------------------------
def init_policy_params(state_dim, action_dim, key):
    """Deterministic init matching the PyTorch module's parameter shapes."""
    dims = [(state_dim, HIDDEN), (HIDDEN, HIDDEN), (HIDDEN, HIDDEN),
            (HIDDEN, action_dim)]
    params = {}
    keys = jax.random.split(key, len(dims) * 2)
    for i, (fan_in, fan_out) in enumerate(dims):
        bound = 1.0 / jnp.sqrt(jnp.float32(fan_in))
        params[f"w{i+1}"] = jax.random.uniform(
            keys[2 * i], (fan_in, fan_out), jnp.float32, -bound, bound)
        params[f"b{i+1}"] = jax.random.uniform(
            keys[2 * i + 1], (1, fan_out), jnp.float32, -bound, bound)
    params["log_std"] = jnp.zeros((action_dim,), jnp.float32)
    return params


def pad_policy_params(params, state_dim, action_dim):
    """Zero-pad hidden/action widths to full 128-lane tiles (inert padding)."""
    h_pad = _round_up(HIDDEN, LANE)
    a_pad = _round_up(action_dim, LANE)

    def pad2(a, rows, cols):
        return jnp.pad(a, ((0, rows - a.shape[0]), (0, cols - a.shape[1])))

    return {
        "w1": pad2(params["w1"], state_dim, h_pad),
        "b1": pad2(params["b1"], 1, h_pad),
        "w2": pad2(params["w2"], h_pad, h_pad),
        "b2": pad2(params["b2"], 1, h_pad),
        "w3": pad2(params["w3"], h_pad, h_pad),
        "b3": pad2(params["b3"], 1, h_pad),
        "w4": pad2(params["w4"], h_pad, a_pad),
        "b4": pad2(params["b4"], 1, a_pad),
    }


class PolicyNetworkPallas:
    def __init__(self, state_dim, action_dim, discrete, key, *,
                 block_b=256, use_bf16=False):
        self.state_dim = state_dim
        self.action_dim = action_dim
        self.discrete = discrete
        self.block_b = block_b
        self.use_bf16 = use_bf16
        self.params = init_policy_params(state_dim, action_dim, key)
        self.padded_params = pad_policy_params(self.params, state_dim, action_dim)

    def __call__(self, states):
        mean, probs = policy_forward_pallas(
            states, self.padded_params, self.action_dim,
            block_b=self.block_b, use_bf16=self.use_bf16)
        if self.discrete:
            # TODO(synk): torch.distributions.Categorical has no Pallas
            # equivalent; return its parameterization (probs).
            return {"probs": probs}
        # Batch-independent covariance head lives in plain JAX (not re-done
        # per grid step inside the kernel).
        std2 = jnp.exp(2.0 * self.params["log_std"])              # exp(log_std)^2
        cov = jnp.eye(self.action_dim, dtype=jnp.float32) * std2
        # TODO(synk): torch.distributions.MultivariateNormal has no Pallas
        # equivalent; return its parameterization (mean, covariance_matrix).
        return {"mean": mean, "covariance_matrix": cov}


if __name__ == "__main__":
    key = jax.random.PRNGKey(0)
    k_params, k_states, k_states2 = jax.random.split(key, 3)

    B, STATE_DIM, ACTION_DIM = 8, 16, 4
    states = jax.random.normal(k_states, (B, STATE_DIM), jnp.float32)

    # Discrete policy (Categorical head)
    policy_d = PolicyNetworkPallas(STATE_DIM, ACTION_DIM, discrete=True, key=k_params)
    out_d = policy_d(states)
    jax.block_until_ready(out_d["probs"])

    # Continuous policy (MultivariateNormal head)
    policy_c = PolicyNetworkPallas(STATE_DIM, ACTION_DIM, discrete=False, key=k_params)
    out_c = policy_c(states)
    jax.block_until_ready(out_c["mean"])
    jax.block_until_ready(out_c["covariance_matrix"])

    # Pure-JAX reference.
    def ref_forward(p, x):
        h = jnp.tanh(x @ p["w1"] + p["b1"])
        h = jnp.tanh(h @ p["w2"] + p["b2"])
        h = jnp.tanh(h @ p["w3"] + p["b3"])
        logits = h @ p["w4"] + p["b4"]
        return logits, jax.nn.softmax(logits, axis=-1)

    p = policy_d.params
    logits_ref, probs_ref = ref_forward(p, states)
    cov_ref = jnp.eye(ACTION_DIM) * jnp.exp(p["log_std"]) ** 2

    assert jnp.allclose(out_c["mean"], logits_ref, atol=1e-4)
    assert jnp.allclose(out_d["probs"], probs_ref, atol=1e-3)
    assert jnp.allclose(out_c["covariance_matrix"], cov_ref, atol=1e-6)
    assert jnp.allclose(jnp.sum(out_d["probs"], axis=-1), 1.0, atol=2e-3)

    # Multi-tile batch grid (B not a multiple of the tile) exercises batch
    # padding/slicing, pipelining, and the parallel batch axis.
    B2 = 40
    states2 = jax.random.normal(k_states2, (B2, STATE_DIM), jnp.float32)
    policy_g = PolicyNetworkPallas(STATE_DIM, ACTION_DIM, discrete=True,
                                   key=k_params, block_b=16)
    out_g = policy_g(states2)
    jax.block_until_ready(out_g["probs"])
    _, probs2_ref = ref_forward(policy_g.params, states2)
    assert out_g["probs"].shape == (B2, ACTION_DIM)
    assert jnp.allclose(out_g["probs"], probs2_ref, atol=1e-3)

    # bf16 MXU-input / f32-accumulate path (v6e/v7x fast path).
    policy_bf16 = PolicyNetworkPallas(STATE_DIM, ACTION_DIM, discrete=True,
                                      key=k_params, use_bf16=True)
    out_b = policy_bf16(states)
    jax.block_until_ready(out_b["probs"])
    assert bool(jnp.all(jnp.isfinite(out_b["probs"])))
    assert jnp.allclose(jnp.sum(out_b["probs"], axis=-1), 1.0, atol=1e-2)

    print("KERNEL_OK")
</pallas_src>

<mosaic_0001>
module attributes {stable_mosaic.version = 11 : i64} {
  func.func @kernel(%arg0: i32, %arg1: memref<8x16xf32, #tpu.memory_space<vmem>>, %arg2: memref<16x128xf32, #tpu.memory_space<vmem>>, %arg3: memref<1x128xf32, #tpu.memory_space<vmem>>, %arg4: memref<128x128xf32, #tpu.memory_space<vmem>>, %arg5: memref<1x128xf32, #tpu.memory_space<vmem>>, %arg6: memref<128x128xf32, #tpu.memory_space<vmem>>, %arg7: memref<1x128xf32, #tpu.memory_space<vmem>>, %arg8: memref<128x128xf32, #tpu.memory_space<vmem>>, %arg9: memref<1x128xf32, #tpu.memory_space<vmem>>, %arg10: memref<8x128xf32, #tpu.memory_space<vmem>>, %arg11: memref<8x128xf32, #tpu.memory_space<vmem>>) attributes {dimension_semantics = [#tpu.dimension_semantics<parallel>], iteration_bounds = array<i64: 1>, scalar_prefetch = 0 : i64, scratch_operands = 0 : i64, tpu.core_type = #tpu.core_type<tc>, window_params = [{transform_indices = @transform_0, window_bounds = array<i64: 8, 16>}, {pipeline_mode = #tpu.pipeline_mode<synchronous>, transform_indices = @transform_1, window_bounds = array<i64: 16, 128>}, {pipeline_mode = #tpu.pipeline_mode<synchronous>, transform_indices = @transform_2, window_bounds = array<i64: 1, 128>}, {pipeline_mode = #tpu.pipeline_mode<synchronous>, transform_indices = @transform_3, window_bounds = array<i64: 128, 128>}, {pipeline_mode = #tpu.pipeline_mode<synchronous>, transform_indices = @transform_4, window_bounds = array<i64: 1, 128>}, {pipeline_mode = #tpu.pipeline_mode<synchronous>, transform_indices = @transform_5, window_bounds = array<i64: 128, 128>}, {pipeline_mode = #tpu.pipeline_mode<synchronous>, transform_indices = @transform_6, window_bounds = array<i64: 1, 128>}, {pipeline_mode = #tpu.pipeline_mode<synchronous>, transform_indices = @transform_7, window_bounds = array<i64: 128, 128>}, {pipeline_mode = #tpu.pipeline_mode<synchronous>, transform_indices = @transform_8, window_bounds = array<i64: 1, 128>}, {transform_indices = @transform_9, window_bounds = array<i64: 8, 128>}, {transform_indices = @transform_10, window_bounds = array<i64: 8, 128>}]} {
    %c0 = arith.constant 0 : index
    %c0_0 = arith.constant 0 : index
    %0 = vector.load %arg1[%c0, %c0_0] : memref<8x16xf32, #tpu.memory_space<vmem>>, vector<8x16xf32>
    %c0_1 = arith.constant 0 : index
    %c0_2 = arith.constant 0 : index
    %1 = vector.load %arg2[%c0_1, %c0_2] : memref<16x128xf32, #tpu.memory_space<vmem>>, vector<16x128xf32>
    %cst = arith.constant dense<0.000000e+00> : vector<8x128xf32>
    %2 = tpu.matmul %0, %1, %cst {dimension_numbers = #tpu.dot_dimension_numbers<[1], [0], [0], [1], [0, 0, 1, 1], [], []>} : vector<8x16xf32>, vector<16x128xf32>, vector<8x128xf32> -> vector<8x128xf32>
    %c0_3 = arith.constant 0 : index
    %c0_4 = arith.constant 0 : index
    %3 = vector.load %arg3[%c0_3, %c0_4] : memref<1x128xf32, #tpu.memory_space<vmem>>, vector<1x128xf32>
    %4 = vector.broadcast %3 : vector<1x128xf32> to vector<8x128xf32>
    %5 = arith.addf %2, %4 : vector<8x128xf32>
    %6 = math.tanh %5 : vector<8x128xf32>
    %c0_5 = arith.constant 0 : index
    %c0_6 = arith.constant 0 : index
    %7 = vector.load %arg4[%c0_5, %c0_6] : memref<128x128xf32, #tpu.memory_space<vmem>>, vector<128x128xf32>
    %cst_7 = arith.constant dense<0.000000e+00> : vector<8x128xf32>
    %8 = tpu.matmul %6, %7, %cst_7 {dimension_numbers = #tpu.dot_dimension_numbers<[1], [0], [0], [1], [0, 0, 1, 1], [], []>} : vector<8x128xf32>, vector<128x128xf32>, vector<8x128xf32> -> vector<8x128xf32>
    %c0_8 = arith.constant 0 : index
    %c0_9 = arith.constant 0 : index
    %9 = vector.load %arg5[%c0_8, %c0_9] : memref<1x128xf32, #tpu.memory_space<vmem>>, vector<1x128xf32>
    %10 = vector.broadcast %9 : vector<1x128xf32> to vector<8x128xf32>
    %11 = arith.addf %8, %10 : vector<8x128xf32>
    %12 = math.tanh %11 : vector<8x128xf32>
    %c0_10 = arith.constant 0 : index
    %c0_11 = arith.constant 0 : index
    %13 = vector.load %arg6[%c0_10, %c0_11] : memref<128x128xf32, #tpu.memory_space<vmem>>, vector<128x128xf32>
    %cst_12 = arith.constant dense<0.000000e+00> : vector<8x128xf32>
    %14 = tpu.matmul %12, %13, %cst_12 {dimension_numbers = #tpu.dot_dimension_numbers<[1], [0], [0], [1], [0, 0, 1, 1], [], []>} : vector<8x128xf32>, vector<128x128xf32>, vector<8x128xf32> -> vector<8x128xf32>
    %c0_13 = arith.constant 0 : index
    %c0_14 = arith.constant 0 : index
    %15 = vector.load %arg7[%c0_13, %c0_14] : memref<1x128xf32, #tpu.memory_space<vmem>>, vector<1x128xf32>
    %16 = vector.broadcast %15 : vector<1x128xf32> to vector<8x128xf32>
    %17 = arith.addf %14, %16 : vector<8x128xf32>
    %18 = math.tanh %17 : vector<8x128xf32>
    %c0_15 = arith.constant 0 : index
    %c0_16 = arith.constant 0 : index
    %19 = vector.load %arg8[%c0_15, %c0_16] : memref<128x128xf32, #tpu.memory_space<vmem>>, vector<128x128xf32>
    %cst_17 = arith.constant dense<0.000000e+00> : vector<8x128xf32>
    %20 = tpu.matmul %18, %19, %cst_17 {dimension_numbers = #tpu.dot_dimension_numbers<[1], [0], [0], [1], [0, 0, 1, 1], [], []>} : vector<8x128xf32>, vector<128x128xf32>, vector<8x128xf32> -> vector<8x128xf32>
    %c0_18 = arith.constant 0 : index
    %c0_19 = arith.constant 0 : index
    %21 = vector.load %arg9[%c0_18, %c0_19] : memref<1x128xf32, #tpu.memory_space<vmem>>, vector<1x128xf32>
    %22 = vector.broadcast %21 : vector<1x128xf32> to vector<8x128xf32>
    %23 = arith.addf %20, %22 : vector<8x128xf32>
    %c0_20 = arith.constant 0 : index
    %c0_21 = arith.constant 0 : index
    %24 = vector.load %arg10[%c0_20, %c0_21] : memref<8x128xf32, #tpu.memory_space<vmem>>, vector<8x128xf32>
    tpu.vector_store %arg10[%c0_20, %c0_21], %23 {strides = array<i32>} : memref<8x128xf32, #tpu.memory_space<vmem>>, vector<8x128xf32>,
    %25 = tpu.iota {dimensions = array<i32: 1>} : vector<8x128xi32>
    %c4_i32 = arith.constant 4 : i32
    %26 = vector.broadcast %c4_i32 : i32 to vector<8x128xi32>
    %27 = arith.cmpi slt, %25, %26 : vector<8x128xi32>
    %cst_22 = arith.constant 0xFF800000 : f32
    %28 = vector.broadcast %cst_22 : f32 to vector<8x128xf32>
    %29 = arith.select %27, %23, %28 : vector<8x128xi1>, vector<8x128xf32>
    %cst_23 = arith.constant dense<0xFF800000> : vector<8xf32>
    %30 = vector.multi_reduction <maximumf>, %29, %cst_23 [1] : vector<8x128xf32> to vector<8xf32>
    %31 = vector.shape_cast %30 : vector<8xf32> to vector<8x1xf32>
    %32 = vector.broadcast %31 : vector<8x1xf32> to vector<8x128xf32>
    %33 = arith.subf %29, %32 : vector<8x128xf32>
    %34 = math.exp %33 : vector<8x128xf32>
    %cst_24 = arith.constant 0.000000e+00 : f32
    %35 = vector.broadcast %cst_24 : f32 to vector<8x128xf32>
    %36 = arith.select %27, %34, %35 : vector<8x128xi1>, vector<8x128xf32>
    %cst_25 = arith.constant dense<0.000000e+00> : vector<8xf32>
    %37 = vector.multi_reduction <add>, %36, %cst_25 [1] : vector<8x128xf32> to vector<8xf32>
    %38 = vector.shape_cast %37 : vector<8xf32> to vector<8x1xf32>
    %39 = tpu.reciprocal %38 {approx = true} : vector<8x1xf32> -> vector<8x1xf32>
    %40 = vector.broadcast %39 : vector<8x1xf32> to vector<8x128xf32>
    %41 = arith.mulf %36, %40 : vector<8x128xf32>
    %c0_26 = arith.constant 0 : index
    %c0_27 = arith.constant 0 : index
    %42 = vector.load %arg11[%c0_26, %c0_27] : memref<8x128xf32, #tpu.memory_space<vmem>>, vector<8x128xf32>
    tpu.vector_store %arg11[%c0_26, %c0_27], %41 {strides = array<i32>} : memref<8x128xf32, #tpu.memory_space<vmem>>, vector<8x128xf32>,
    return
  }
  func.func @transform_0(%arg0: i32) -> (i32, i32) {
    %c0_i32 = arith.constant 0 : i32
    %c0_i32_0 = arith.constant 0 : i32
    return %arg0, %c0_i32 : i32, i32
  }
  func.func @transform_1(%arg0: i32) -> (i32, i32) {
    %c0_i32 = arith.constant 0 : i32
    %c0_i32_0 = arith.constant 0 : i32
    %c0_i32_1 = arith.constant 0 : i32
    return %c0_i32, %c0_i32_0 : i32, i32
  }
  func.func @transform_2(%arg0: i32) -> (i32, i32) {
    %c0_i32 = arith.constant 0 : i32
    %c0_i32_0 = arith.constant 0 : i32
    %c0_i32_1 = arith.constant 0 : i32
    return %c0_i32, %c0_i32_0 : i32, i32
  }
  func.func @transform_3(%arg0: i32) -> (i32, i32) {
    %c0_i32 = arith.constant 0 : i32
    %c0_i32_0 = arith.constant 0 : i32
    %c0_i32_1 = arith.constant 0 : i32
    return %c0_i32, %c0_i32_0 : i32, i32
  }
  func.func @transform_4(%arg0: i32) -> (i32, i32) {
    %c0_i32 = arith.constant 0 : i32
    %c0_i32_0 = arith.constant 0 : i32
    %c0_i32_1 = arith.constant 0 : i32
    return %c0_i32, %c0_i32_0 : i32, i32
  }
  func.func @transform_5(%arg0: i32) -> (i32, i32) {
    %c0_i32 = arith.constant 0 : i32
    %c0_i32_0 = arith.constant 0 : i32
    %c0_i32_1 = arith.constant 0 : i32
    return %c0_i32, %c0_i32_0 : i32, i32
  }
  func.func @transform_6(%arg0: i32) -> (i32, i32) {
    %c0_i32 = arith.constant 0 : i32
    %c0_i32_0 = arith.constant 0 : i32
    %c0_i32_1 = arith.constant 0 : i32
    return %c0_i32, %c0_i32_0 : i32, i32
  }
  func.func @transform_7(%arg0: i32) -> (i32, i32) {
    %c0_i32 = arith.constant 0 : i32
    %c0_i32_0 = arith.constant 0 : i32
    %c0_i32_1 = arith.constant 0 : i32
    return %c0_i32, %c0_i32_0 : i32, i32
  }
  func.func @transform_8(%arg0: i32) -> (i32, i32) {
    %c0_i32 = arith.constant 0 : i32
    %c0_i32_0 = arith.constant 0 : i32
    %c0_i32_1 = arith.constant 0 : i32
    return %c0_i32, %c0_i32_0 : i32, i32
  }
  func.func @transform_9(%arg0: i32) -> (i32, i32) {
    %c0_i32 = arith.constant 0 : i32
    %c0_i32_0 = arith.constant 0 : i32
    return %arg0, %c0_i32 : i32, i32
  }
  func.func @transform_10(%arg0: i32) -> (i32, i32) {
    %c0_i32 = arith.constant 0 : i32
    %c0_i32_0 = arith.constant 0 : i32
    return %arg0, %c0_i32 : i32, i32
  }
}

</mosaic_0001>

<llo_original>
// kernel: tpu_custom_call.1
$region0: #{tpu_custom_call.1}
  #allocation0 [shape = 'u32[]', space=smem, size = 0x4, offset = 0x4, fixed_abs, tag = 'smem constant byte address 0x4 - core index']
  #allocation1 [shape = 'u32[144,128]{1,0:T(1,128)}', space=vmem, size = 0x12000, scoped, tag = 'internal scratch']
  %s0 = inlined_call_operand.hbm [shape: f32[8,16], index: 0, kind: input, shape index: {}]
  %s1 = inlined_call_operand.hbm [shape: f32[16,128], index: 1, kind: input, shape index: {}]
  %s2 = inlined_call_operand.vmem [shape: f32[1,128], index: 2, kind: input, shape index: {}]
  %s3 = inlined_call_operand.hbm [shape: f32[128,128], index: 3, kind: input, shape index: {}]
  %s4 = inlined_call_operand.vmem [shape: f32[1,128], index: 4, kind: input, shape index: {}]
  %s5 = inlined_call_operand.hbm [shape: f32[128,128], index: 5, kind: input, shape index: {}]
  %s6 = inlined_call_operand.vmem [shape: f32[1,128], index: 6, kind: input, shape index: {}]
  %s7 = inlined_call_operand.hbm [shape: f32[128,128], index: 7, kind: input, shape index: {}]
  %s8 = inlined_call_operand.vmem [shape: f32[1,128], index: 8, kind: input, shape index: {}]
  %s9 = inlined_call_operand.hbm [shape: f32[8,128], index: 9, kind: output, shape index: {0}]
  %s10 = inlined_call_operand.hbm [shape: f32[8,128], index: 10, kind: output, shape index: {1}]
  %11 = xla_tuple %s9, %s10
  %s12 = sld [smem:[#allocation0]]
  $region74: #{tpu_custom_call.1} parent=0
    _
  %s14 = ssub.s32 1, %s12
  %s15 = scalar_select 0, %s14, %s12
  $region1: #{tpu_custom_call.1} parent=0
    #allocation2 [shape = 'u8[4096]{0}', space=vmem, size = 0x1000, scoped, tag = 'input window, operand 0, single buffered']
    #allocation3 [shape = 's32[1]{0}', space=sflag, size = 0x4, scoped, tag = 'scoped memory for tpu_custom_call.1']
    #allocation4 [shape = 's32[1]{0}', space=sflag, size = 0x4, scoped, tag = 'scoped memory for tpu_custom_call.1']
    #allocation5 [shape = 'u8[8192]{0}', space=vmem, size = 0x2000, scoped, tag = 'input window, operand 1, single buffered']
    #allocation6 [shape = 's32[1]{0}', space=sflag, size = 0x4, scoped, tag = 'scoped memory for tpu_custom_call.1']
    #allocation7 [shape = 'u8[65536]{0}', space=vmem, size = 0x10000, scoped, tag = 'input window, operand 3, single buffered']
    #allocation8 [shape = 'u8[65536]{0}', space=vmem, size = 0x10000, scoped, tag = 'input window, operand 5, single buffered']
    #allocation9 [shape = 's32[1]{0}', space=sflag, size = 0x4, scoped, tag = 'scoped memory for tpu_custom_call.1']
    #allocation10 [shape = 'u8[65536]{0}', space=vmem, size = 0x10000, scoped, tag = 'input window, operand 7, single buffered']
    #allocation11 [shape = 'u8[4096]{0}', space=vmem, size = 0x1000, scoped, tag = 'output window, operand 0, single buffered']
    #allocation12 [shape = 'u8[4096]{0}', space=vmem, size = 0x1000, scoped, tag = 'output window, operand 1, single buffered']
    #allocation13 [shape = 's32[1]{0}', space=sflag, size = 0x4, scoped, tag = 'scoped memory for tpu_custom_call.1']
    %16 = vsyncpa [#allocation3], 0
    %17 = vsyncpa [#allocation6], 0
    %18 = vsyncpa [#allocation9], 0
    %19 = vsyncpa [#allocation4], 0
    %20 = vsyncpa [#allocation13], 0
    // Predicated region
    $region2: #{tpu_custom_call.1} parent=1 // pred_check
      _
    $region3: #{tpu_custom_call.1} parent=1 // pred_check_branch
      %22 = sbr.rel (0) target = $region5
    $region4: #{tpu_custom_call.1} parent=1 // pred_region
      %s24 = ssub.s32 128, 128
      %25 = vsyncadd [#allocation3], %s24
      %s27 = sshll.u32 [#allocation2], 4
      %s28 = int_to_ptr.vmem [resolvable:$true] %s27
      %30 = dma.hbm_to_vmem [thread:$0]  %s0, 128, %s28, [#allocation3]
    $region5: #{tpu_custom_call.1} parent=1 // pred_fallthru
      _
    // Predicated region
    $region6: #{tpu_custom_call.1} parent=1 // pred_check
      _
    $region7: #{tpu_custom_call.1} parent=1 // pred_check_branch
      %32 = sbr.rel (0) target = $region9
    $region8: #{tpu_custom_call.1} parent=1 // pred_region
      %s34 = ssub.s32 256, 256
      %35 = vsyncadd [#allocation6], %s34
      %s36 = sshll.u32 [#allocation5], 4
      %s37 = int_to_ptr.vmem [resolvable:$true] %s36
      %42 = dma.hbm_to_vmem [thread:$0]  %s1, 256, %s37, [#allocation6], 128, 128, 8
    $region9: #{tpu_custom_call.1} parent=1 // pred_fallthru
      _
    // Predicated region
    $region10: #{tpu_custom_call.1} parent=1 // pred_check
      _
    $region11: #{tpu_custom_call.1} parent=1 // pred_check_branch
      %44 = sbr.rel (0) target = $region13
    $region12: #{tpu_custom_call.1} parent=1 // pred_region
      _
    $region13: #{tpu_custom_call.1} parent=1 // pred_fallthru
      _
    // Predicated region
    $region14: #{tpu_custom_call.1} parent=1 // pred_check
      _
    $region15: #{tpu_custom_call.1} parent=1 // pred_check_branch
      %46 = sbr.rel (0) target = $region17
    $region16: #{tpu_custom_call.1} parent=1 // pred_region
      %s48 = ssub.s32 2048, 2048
      %49 = vsyncadd [#allocation6], %s48
      %s50 = sshll.u32 [#allocation7], 4
      %s51 = int_to_ptr.vmem [resolvable:$true] %s50
      %56 = dma.hbm_to_vmem [thread:$0]  %s3, 2048, %s51, [#allocation6], 128, 128, 8
    $region17: #{tpu_custom_call.1} parent=1 // pred_fallthru
      _
    // Predicated region
    $region18: #{tpu_custom_call.1} parent=1 // pred_check
      _
    $region19: #{tpu_custom_call.1} parent=1 // pred_check_branch
      %58 = sbr.rel (0) target = $region21
    $region20: #{tpu_custom_call.1} parent=1 // pred_region
      _
    $region21: #{tpu_custom_call.1} parent=1 // pred_fallthru
      _
    // Predicated region
    $region22: #{tpu_custom_call.1} parent=1 // pred_check
      _
    $region23: #{tpu_custom_call.1} parent=1 // pred_check_branch
      %60 = sbr.rel (0) target = $region25
    $region24: #{tpu_custom_call.1} parent=1 // pred_region
      %s62 = ssub.s32 2048, 2048
      %63 = vsyncadd [#allocation9], %s62
      %s64 = sshll.u32 [#allocation8], 4
      %s65 = int_to_ptr.vmem [resolvable:$true] %s64
      %70 = dma.hbm_to_vmem [thread:$0]  %s5, 2048, %s65, [#allocation9], 128, 128, 8
    $region25: #{tpu_custom_call.1} parent=1 // pred_fallthru
      _
    // Predicated region
    $region26: #{tpu_custom_call.1} parent=1 // pred_check
      _
    $region27: #{tpu_custom_call.1} parent=1 // pred_check_branch
      %72 = sbr.rel (0) target = $region29
    $region28: #{tpu_custom_call.1} parent=1 // pred_region
      _
    $region29: #{tpu_custom_call.1} parent=1 // pred_fallthru
      _
    // Predicated region
    $region30: #{tpu_custom_call.1} parent=1 // pred_check
      _
    $region31: #{tpu_custom_call.1} parent=1 // pred_check_branch
      %74 = sbr.rel (0) target = $region33
    $region32: #{tpu_custom_call.1} parent=1 // pred_region
      %s76 = ssub.s32 2048, 2048
      %77 = vsyncadd [#allocation9], %s76
      %s78 = sshll.u32 [#allocation10], 4
      %s79 = int_to_ptr.vmem [resolvable:$true] %s78
      %84 = dma.hbm_to_vmem [thread:$0]  %s7, 2048, %s79, [#allocation9], 128, 128, 8
    $region33: #{tpu_custom_call.1} parent=1 // pred_fallthru
      _
    // Predicated region
    $region34: #{tpu_custom_call.1} parent=1 // pred_check
      _
    $region35: #{tpu_custom_call.1} parent=1 // pred_check_branch
      %86 = sbr.rel (0) target = $region37
    $region36: #{tpu_custom_call.1} parent=1 // pred_region
      _
    $region37: #{tpu_custom_call.1} parent=1 // pred_fallthru
      _
    // Predicated region
    $region38: #{tpu_custom_call.1} parent=1 // pred_check
      _
    $region39: #{tpu_custom_call.1} parent=1 // pred_check_branch
      %88 = sbr.rel (0) target = $region41
    $region40: #{tpu_custom_call.1} parent=1 // pred_region
      %89 = dma.done [#allocation3], 128
    $region41: #{tpu_custom_call.1} parent=1 // pred_fallthru
      _
    // Predicated region
    $region42: #{tpu_custom_call.1} parent=1 // pred_check
      _
    $region43: #{tpu_custom_call.1} parent=1 // pred_check_branch
      %91 = sbr.rel (0) target = $region45
    $region44: #{tpu_custom_call.1} parent=1 // pred_region
      %92 = dma.done [#allocation6], 256
    $region45: #{tpu_custom_call.1} parent=1 // pred_fallthru
      _
    // Predicated region
    $region46: #{tpu_custom_call.1} parent=1 // pred_check
      _
    $region47: #{tpu_custom_call.1} parent=1 // pred_check_branch
      %94 = sbr.rel (0) target = $region49
    $region48: #{tpu_custom_call.1} parent=1 // pred_region
      %95 = dma.done [#allocation6], 2048
    $region49: #{tpu_custom_call.1} parent=1 // pred_fallthru
      _
    // Predicated region
    $region50: #{tpu_custom_call.1} parent=1 // pred_check
      _
    $region51: #{tpu_custom_call.1} parent=1 // pred_check_branch
      %97 = sbr.rel (0) target = $region53
    $region52: #{tpu_custom_call.1} parent=1 // pred_region
      %98 = dma.done [#allocation9], 2048
    $region53: #{tpu_custom_call.1} parent=1 // pred_fallthru
      _
    // Predicated region
    $region54: #{tpu_custom_call.1} parent=1 // pred_check
      _
    $region55: #{tpu_custom_call.1} parent=1 // pred_check_branch
      %100 = sbr.rel (0) target = $region57
    $region56: #{tpu_custom_call.1} parent=1 // pred_region
      %101 = dma.done [#allocation9], 2048
    $region57: #{tpu_custom_call.1} parent=1 // pred_fallthru
      _
    %v102 = vld [vmem:[#allocation2] sm:$0xff]
    %v103 = vld [vmem:[#allocation5] sm:$0xff]
    %v104 = vld [vmem:[#allocation5 + $0x8] sm:$0xff]
    %v105 = vld [vmem:[%s2] sm:$0x1]
    %v107 = vlaneseq
    %v108 = vshrl.u32 %v107, 7
    %v109 = vsub.s32 0, %v108
    %v110 = vrot.slane %v105, %v109
    %vm112 = vcmask 130048
    %v114 = vsel %vm112, %v102, 0
    %116 = vmatprep.subr.mxu0 0.0
    %117 = vmatpush1.msra.mxu0 %v103
    %118 = vmatprep.subr.mxu0 0.0
    %119 = vmatpush1.msra.mxu0 %v104
    %120 = vmatprep.subr.mxu0 0.0
    %121 = vmatpush1.msra.mxu0 0.0
    %122 = vmatprep.subr.mxu0 0.0
    %123 = vmatpush1.msra.mxu0 0.0
    %124 = vmatprep.subr.mxu0 0.0
    %125 = vmatpush1.msra.mxu0 0.0
    %126 = vmatprep.subr.mxu0 0.0
    %127 = vmatpush1.msra.mxu0 0.0
    %128 = vmatprep.subr.mxu0 0.0
    %129 = vmatpush1.msra.mxu0 0.0
    %130 = vmatprep.subr.mxu0 0.0
    %131 = vmatpush1.msra.mxu0 0.0
    %132 = vmatprep.subr.mxu0 0.0
    %133 = vmatpush1.msra.mxu0 0.0
    %134 = vmatprep.subr.mxu0 0.0
    %135 = vmatpush1.msra.mxu0 0.0
    %136 = vmatprep.subr.mxu0 0.0
    %137 = vmatpush1.msra.mxu0 0.0
    %138 = vmatprep.subr.mxu0 0.0
    %139 = vmatpush1.msra.mxu0 0.0
    %140 = vmatprep.subr.mxu0 0.0
    %141 = vmatpush1.msra.mxu0 0.0
    %142 = vmatprep.subr.mxu0 0.0
    %143 = vmatpush1.msra.mxu0 0.0
    %144 = vmatprep.subr.mxu0 0.0
    %145 = vmatpush1.msra.mxu0 0.0
    %146 = vmatprep.subr.mxu0 0.0
    %147 = vmatpush1.msra.mxu0 0.0
    %148 = vmatprep.subr.mxu0 0.0
    %149 = vmatpush1.msra.mxu0 0.0
    %150 = vmatprep.subr.mxu0 0.0
    %151 = vmatpush1.msra.mxu0 0.0
    %152 = vmatprep.subr.mxu0 0.0
    %153 = vmatpush1.msra.mxu0 0.0
    %154 = vmatprep.subr.mxu0 0.0
    %155 = vmatpush1.msra.mxu0 0.0
    %156 = vmatprep.subr.mxu0 0.0
    %157 = vmatpush1.msra.mxu0 0.0
    %158 = vmatprep.subr.mxu0 0.0
    %159 = vmatpush1.msra.mxu0 0.0
    %160 = vmatprep.subr.mxu0 0.0
    %161 = vmatpush1.msra.mxu0 0.0
    %162 = vmatprep.subr.mxu0 0.0
    %163 = vmatpush1.msra.mxu0 0.0
    %164 = vmatprep.subr.mxu0 0.0
    %165 = vmatpush1.msra.mxu0 0.0
    %166 = vmatprep.subr.mxu0 0.0
    %167 = vmatpush1.msra.mxu0 0.0
    %168 = vmatprep.subr.mxu0 0.0
    %169 = vmatpush1.msra.mxu0 0.0
    %170 = vmatprep.subr.mxu0 0.0
    %171 = vmatpush1.msra.mxu0 0.0
    %172 = vmatprep.subr.mxu0 0.0
    %173 = vmatpush1.msra.mxu0 0.0
    %174 = vmatprep.subr.mxu0 0.0
    %175 = vmatpush1.msra.mxu0 0.0
    %176 = vmatprep.subr.mxu0 0.0
    %177 = vmatpush1.msra.mxu0 0.0
    %178 = vmatprep.subr.mxu0 0.0
    %179 = vmatpush1.msra.mxu0 0.0
    %180 = vmatprep.mubr.f32.mxu0 0.0
    %181 = vmatmul.mubr.f32.gmra.mrb[0].mxu0 %v114
    %v182 = vpop.f32.mrb[0].mxu0
    %v183 = vadd.f32 %v110, %v182
    %v184 = vpop.f32.mrb[0].mxu0
    %185 = vdwg.mxu0
    %v186 = vtanh.pop %v183
    %v187 = vld [vmem:[#allocation7] sm:$0xff]
    %v188 = vld [vmem:[#allocation7 + $0x8] sm:$0xff]
    %v189 = vld [vmem:[#allocation7 + $0x10] sm:$0xff]
    %v190 = vld [vmem:[#allocation7 + $0x18] sm:$0xff]
    %v191 = vld [vmem:[#allocation7 + $0x20] sm:$0xff]
    %v192 = vld [vmem:[#allocation7 + $0x28] sm:$0xff]
    %v193 = vld [vmem:[#allocation7 + $0x30] sm:$0xff]
    %v194 = vld [vmem:[#allocation7 + $0x38] sm:$0xff]
    %v195 = vld [vmem:[#allocation7 + $0x40] sm:$0xff]
    %v196 = vld [vmem:[#allocation7 + $0x48] sm:$0xff]
    %v197 = vld [vmem:[#allocation7 + $0x50] sm:$0xff]
    %v198 = vld [vmem:[#allocation7 + $0x58] sm:$0xff]
    %v199 = vld [vmem:[#allocation7 + $0x60] sm:$0xff]
    %v200 = vld [vmem:[#allocation7 + $0x68] sm:$0xff]
    %v201 = vld [vmem:[#allocation7 + $0x70] sm:$0xff]
    %v202 = vld [vmem:[#allocation7 + $0x78] sm:$0xff]
    %v203 = vld [vmem:[%s4] sm:$0x1]
    %v205 = vlaneseq
    %v206 = vshrl.u32 %v205, 7
    %v207 = vsub.s32 0, %v206
    %v208 = vrot.slane %v203, %v207
    %210 = vmatprep.subr.mxu0 0.0
    %211 = vmatpush1.msra.mxu0 %v187
    %212 = vmatprep.subr.mxu0 0.0
    %213 = vmatpush1.msra.mxu0 %v188
    %214 = vmatprep.subr.mxu0 0.0
    %215 = vmatpush1.msra.mxu0 %v189
    %216 = vmatprep.subr.mxu0 0.0
    %217 = vmatpush1.msra.mxu0 %v190
    %218 = vmatprep.subr.mxu0 0.0
    %219 = vmatpush1.msra.mxu0 %v191
    %220 = vmatprep.subr.mxu0 0.0
    %221 = vmatpush1.msra.mxu0 %v192
    %222 = vmatprep.subr.mxu0 0.0
    %223 = vmatpush1.msra.mxu0 %v193
    %224 = vmatprep.subr.mxu0 0.0
    %225 = vmatpush1.msra.mxu0 %v194
    %226 = vmatprep.subr.mxu0 0.0
    %227 = vmatpush1.msra.mxu0 %v195
    %228 = vmatprep.subr.mxu0 0.0
    %229 = vmatpush1.msra.mxu0 %v196
    %230 = vmatprep.subr.mxu0 0.0
    %231 = vmatpush1.msra.mxu0 %v197
    %232 = vmatprep.subr.mxu0 0.0
    %233 = vmatpush1.msra.mxu0 %v198
    %234 = vmatprep.subr.mxu0 0.0
    %235 = vmatpush1.msra.mxu0 %v199
    %236 = vmatprep.subr.mxu0 0.0
    %237 = vmatpush1.msra.mxu0 %v200
    %238 = vmatprep.subr.mxu0 0.0
    %239 = vmatpush1.msra.mxu0 %v201
    %240 = vmatprep.subr.mxu0 0.0
    %241 = vmatpush1.msra.mxu0 %v202
    %242 = vmatprep.subr.mxu0 0.0
    %243 = vmatpush1.msra.mxu0 0.0
    %244 = vmatprep.subr.mxu0 0.0
    %245 = vmatpush1.msra.mxu0 0.0
    %246 = vmatprep.subr.mxu0 0.0
    %247 = vmatpush1.msra.mxu0 0.0
    %248 = vmatprep.subr.mxu0 0.0
    %249 = vmatpush1.msra.mxu0 0.0
    %250 = vmatprep.subr.mxu0 0.0
    %251 = vmatpush1.msra.mxu0 0.0
    %252 = vmatprep.subr.mxu0 0.0
    %253 = vmatpush1.msra.mxu0 0.0
    %254 = vmatprep.subr.mxu0 0.0
    %255 = vmatpush1.msra.mxu0 0.0
    %256 = vmatprep.subr.mxu0 0.0
    %257 = vmatpush1.msra.mxu0 0.0
    %258 = vmatprep.subr.mxu0 0.0
    %259 = vmatpush1.msra.mxu0 0.0
    %260 = vmatprep.subr.mxu0 0.0
    %261 = vmatpush1.msra.mxu0 0.0
    %262 = vmatprep.subr.mxu0 0.0
    %263 = vmatpush1.msra.mxu0 0.0
    %264 = vmatprep.subr.mxu0 0.0
    %265 = vmatpush1.msra.mxu0 0.0
    %266 = vmatprep.subr.mxu0 0.0
    %267 = vmatpush1.msra.mxu0 0.0
    %268 = vmatprep.subr.mxu0 0.0
    %269 = vmatpush1.msra.mxu0 0.0
    %270 = vmatprep.subr.mxu0 0.0
    %271 = vmatpush1.msra.mxu0 0.0
    %272 = vmatprep.subr.mxu0 0.0
    %273 = vmatpush1.msra.mxu0 0.0
    %274 = vmatprep.mubr.f32.mxu0 0.0
    %275 = vmatmul.mubr.f32.gmra.mrb[0].mxu0 %v186
    %v276 = vpop.f32.mrb[0].mxu0
    %v277 = vadd.f32 %v208, %v276
    %v278 = vpop.f32.mrb[0].mxu0
    %279 = vdwg.mxu0
    %v280 = vtanh.pop %v277
    %v281 = vld [vmem:[#allocation8] sm:$0xff]
    %v282 = vld [vmem:[#allocation8 + $0x8] sm:$0xff]
    %v283 = vld [vmem:[#allocation8 + $0x10] sm:$0xff]
    %v284 = vld [vmem:[#allocation8 + $0x18] sm:$0xff]
    %v285 = vld [vmem:[#allocation8 + $0x20] sm:$0xff]
    %v286 = vld [vmem:[#allocation8 + $0x28] sm:$0xff]
    %v287 = vld [vmem:[#allocation8 + $0x30] sm:$0xff]
    %v288 = vld [vmem:[#allocation8 + $0x38] sm:$0xff]
    %v289 = vld [vmem:[#allocation8 + $0x40] sm:$0xff]
    %v290 = vld [vmem:[#allocation8 + $0x48] sm:$0xff]
    %v291 = vld [vmem:[#allocation8 + $0x50] sm:$0xff]
    %v292 = vld [vmem:[#allocation8 + $0x58] sm:$0xff]
    %v293 = vld [vmem:[#allocation8 + $0x60] sm:$0xff]
    %v294 = vld [vmem:[#allocation8 + $0x68] sm:$0xff]
    %v295 = vld [vmem:[#allocation8 + $0x70] sm:$0xff]
    %v296 = vld [vmem:[#allocation8 + $0x78] sm:$0xff]
    %v297 = vld [vmem:[%s6] sm:$0x1]
    %v299 = vlaneseq
    %v300 = vshrl.u32 %v299, 7
    %v301 = vsub.s32 0, %v300
    %v302 = vrot.slane %v297, %v301
    %304 = vmatprep.subr.mxu0 0.0
    %305 = vmatpush1.msra.mxu0 %v281
    %306 = vmatprep.subr.mxu0 0.0
    %307 = vmatpush1.msra.mxu0 %v282
    %308 = vmatprep.subr.mxu0 0.0
    %309 = vmatpush1.msra.mxu0 %v283
    %310 = vmatprep.subr.mxu0 0.0
    %311 = vmatpush1.msra.mxu0 %v284
    %312 = vmatprep.subr.mxu0 0.0
    %313 = vmatpush1.msra.mxu0 %v285
    %314 = vmatprep.subr.mxu0 0.0
    %315 = vmatpush1.msra.mxu0 %v286
    %316 = vmatprep.subr.mxu0 0.0
    %317 = vmatpush1.msra.mxu0 %v287
    %318 = vmatprep.subr.mxu0 0.0
    %319 = vmatpush1.msra.mxu0 %v288
    %320 = vmatprep.subr.mxu0 0.0
    %321 = vmatpush1.msra.mxu0 %v289
    %322 = vmatprep.subr.mxu0 0.0
    %323 = vmatpush1.msra.mxu0 %v290
    %324 = vmatprep.subr.mxu0 0.0
    %325 = vmatpush1.msra.mxu0 %v291
    %326 = vmatprep.subr.mxu0 0.0
    %327 = vmatpush1.msra.mxu0 %v292
    %328 = vmatprep.subr.mxu0 0.0
    %329 = vmatpush1.msra.mxu0 %v293
    %330 = vmatprep.subr.mxu0 0.0
    %331 = vmatpush1.msra.mxu0 %v294
    %332 = vmatprep.subr.mxu0 0.0
    %333 = vmatpush1.msra.mxu0 %v295
    %334 = vmatprep.subr.mxu0 0.0
    %335 = vmatpush1.msra.mxu0 %v296
    %336 = vmatprep.subr.mxu0 0.0
    %337 = vmatpush1.msra.mxu0 0.0
    %338 = vmatprep.subr.mxu0 0.0
    %339 = vmatpush1.msra.mxu0 0.0
    %340 = vmatprep.subr.mxu0 0.0
    %341 = vmatpush1.msra.mxu0 0.0
    %342 = vmatprep.subr.mxu0 0.0
    %343 = vmatpush1.msra.mxu0 0.0
    %344 = vmatprep.subr.mxu0 0.0
    %345 = vmatpush1.msra.mxu0 0.0
    %346 = vmatprep.subr.mxu0 0.0
    %347 = vmatpush1.msra.mxu0 0.0
    %348 = vmatprep.subr.mxu0 0.0
    %349 = vmatpush1.msra.mxu0 0.0
    %350 = vmatprep.subr.mxu0 0.0
    %351 = vmatpush1.msra.mxu0 0.0
    %352 = vmatprep.subr.mxu0 0.0
    %353 = vmatpush1.msra.mxu0 0.0
    %354 = vmatprep.subr.mxu0 0.0
    %355 = vmatpush1.msra.mxu0 0.0
    %356 = vmatprep.subr.mxu0 0.0
    %357 = vmatpush1.msra.mxu0 0.0
    %358 = vmatprep.subr.mxu0 0.0
    %359 = vmatpush1.msra.mxu0 0.0
    %360 = vmatprep.subr.mxu0 0.0
    %361 = vmatpush1.msra.mxu0 0.0
    %362 = vmatprep.subr.mxu0 0.0
    %363 = vmatpush1.msra.mxu0 0.0
    %364 = vmatprep.subr.mxu0 0.0
    %365 = vmatpush1.msra.mxu0 0.0
    %366 = vmatprep.subr.mxu0 0.0
    %367 = vmatpush1.msra.mxu0 0.0
    %368 = vmatprep.mubr.f32.mxu0 0.0
    %369 = vmatmul.mubr.f32.gmra.mrb[0].mxu0 %v280
    %v370 = vpop.f32.mrb[0].mxu0
    %v371 = vadd.f32 %v302, %v370
    %v372 = vpop.f32.mrb[0].mxu0
    %373 = vdwg.mxu0
    %v374 = vtanh.pop %v371
    %v375 = vld [vmem:[#allocation10] sm:$0xff]
    %v376 = vld [vmem:[#allocation10 + $0x8] sm:$0xff]
    %v377 = vld [vmem:[#allocation10 + $0x10] sm:$0xff]
    %v378 = vld [vmem:[#allocation10 + $0x18] sm:$0xff]
    %v379 = vld [vmem:[#allocation10 + $0x20] sm:$0xff]
    %v380 = vld [vmem:[#allocation10 + $0x28] sm:$0xff]
    %v381 = vld [vmem:[#allocation10 + $0x30] sm:$0xff]
    %v382 = vld [vmem:[#allocation10 + $0x38] sm:$0xff]
    %v383 = vld [vmem:[#allocation10 + $0x40] sm:$0xff]
    %v384 = vld [vmem:[#allocation10 + $0x48] sm:$0xff]
    %v385 = vld [vmem:[#allocation10 + $0x50] sm:$0xff]
    %v386 = vld [vmem:[#allocation10 + $0x58] sm:$0xff]
    %v387 = vld [vmem:[#allocation10 + $0x60] sm:$0xff]
    %v388 = vld [vmem:[#allocation10 + $0x68] sm:$0xff]
    %v389 = vld [vmem:[#allocation10 + $0x70] sm:$0xff]
    %v390 = vld [vmem:[#allocation10 + $0x78] sm:$0xff]
    %v391 = vld [vmem:[%s8] sm:$0x1]
    %v393 = vlaneseq
    %v394 = vshrl.u32 %v393, 7
    %v395 = vsub.s32 0, %v394
    %v396 = vrot.slane %v391, %v395
    %398 = vmatprep.subr.mxu0 0.0
    %399 = vmatpush1.msra.mxu0 %v375
    %400 = vmatprep.subr.mxu0 0.0
    %401 = vmatpush1.msra.mxu0 %v376
    %402 = vmatprep.subr.mxu0 0.0
    %403 = vmatpush1.msra.mxu0 %v377
    %404 = vmatprep.subr.mxu0 0.0
    %405 = vmatpush1.msra.mxu0 %v378
    %406 = vmatprep.subr.mxu0 0.0
    %407 = vmatpush1.msra.mxu0 %v379
    %408 = vmatprep.subr.mxu0 0.0
    %409 = vmatpush1.msra.mxu0 %v380
    %410 = vmatprep.subr.mxu0 0.0
    %411 = vmatpush1.msra.mxu0 %v381
    %412 = vmatprep.subr.mxu0 0.0
    %413 = vmatpush1.msra.mxu0 %v382
    %414 = vmatprep.subr.mxu0 0.0
    %415 = vmatpush1.msra.mxu0 %v383
    %416 = vmatprep.subr.mxu0 0.0
    %417 = vmatpush1.msra.mxu0 %v384
    %418 = vmatprep.subr.mxu0 0.0
    %419 = vmatpush1.msra.mxu0 %v385
    %420 = vmatprep.subr.mxu0 0.0
    %421 = vmatpush1.msra.mxu0 %v386
    %422 = vmatprep.subr.mxu0 0.0
    %423 = vmatpush1.msra.mxu0 %v387
    %424 = vmatprep.subr.mxu0 0.0
    %425 = vmatpush1.msra.mxu0 %v388
    %426 = vmatprep.subr.mxu0 0.0
    %427 = vmatpush1.msra.mxu0 %v389
    %428 = vmatprep.subr.mxu0 0.0
    %429 = vmatpush1.msra.mxu0 %v390
    %430 = vmatprep.subr.mxu0 0.0
    %431 = vmatpush1.msra.mxu0 0.0
    %432 = vmatprep.subr.mxu0 0.0
    %433 = vmatpush1.msra.mxu0 0.0
    %434 = vmatprep.subr.mxu0 0.0
    %435 = vmatpush1.msra.mxu0 0.0
    %436 = vmatprep.subr.mxu0 0.0
    %437 = vmatpush1.msra.mxu0 0.0
    %438 = vmatprep.subr.mxu0 0.0
    %439 = vmatpush1.msra.mxu0 0.0
    %440 = vmatprep.subr.mxu0 0.0
    %441 = vmatpush1.msra.mxu0 0.0
    %442 = vmatprep.subr.mxu0 0.0
    %443 = vmatpush1.msra.mxu0 0.0
    %444 = vmatprep.subr.mxu0 0.0
    %445 = vmatpush1.msra.mxu0 0.0
    %446 = vmatprep.subr.mxu0 0.0
    %447 = vmatpush1.msra.mxu0 0.0
    %448 = vmatprep.subr.mxu0 0.0
    %449 = vmatpush1.msra.mxu0 0.0
    %450 = vmatprep.subr.mxu0 0.0
    %451 = vmatpush1.msra.mxu0 0.0
    %452 = vmatprep.subr.mxu0 0.0
    %453 = vmatpush1.msra.mxu0 0.0
    %454 = vmatprep.subr.mxu0 0.0
    %455 = vmatpush1.msra.mxu0 0.0
    %456 = vmatprep.subr.mxu0 0.0
    %457 = vmatpush1.msra.mxu0 0.0
    %458 = vmatprep.subr.mxu0 0.0
    %459 = vmatpush1.msra.mxu0 0.0
    %460 = vmatprep.subr.mxu0 0.0
    %461 = vmatpush1.msra.mxu0 0.0
    %462 = vmatprep.mubr.f32.mxu0 0.0
    %463 = vmatmul.mubr.f32.gmra.mrb[0].mxu0 %v374
    %v464 = vpop.f32.mrb[0].mxu0
    %v465 = vadd.f32 %v396, %v464
    %v466 = vpop.f32.mrb[0].mxu0
    %467 = vdwg.mxu0
    %468 = vst [vmem:[#allocation11] sm:$0xff] %v465
    %v469 = vlaneseq
    %v470 = vand.u32 %v469, 127
    %vm471 = vcmp.lt.s32.totalorder %v470, 4
    %v472 = vsel %vm471, %v465, -inf
    %473 = vmax.xlane.f32.xlu0 %v472
    %v474 = vpop.xlane.xlu0 %473
    %v475 = vsub.f32 %v472, %v474
    %v476 = vmul.f32 %v475, 1.442695
    %v477 = vpow.pop %v476
    %v478 = vsel %vm471, %v477, 0.0
    %479 = vadd.xlane.f32.xlu0 %v478
    %v480 = vpop.xlane.xlu0 %479
    %v481 = vrcp.pop %v480
    %v482 = vmul.f32 %v478, %v481
    %483 = vst [vmem:[#allocation12] sm:$0xff] %v482
    // Predicated region
    $region58: #{tpu_custom_call.1} parent=1 // pred_check
      _
    $region59: #{tpu_custom_call.1} parent=1 // pred_check_branch
      %485 = sbr.rel (0) target = $region61
    $region60: #{tpu_custom_call.1} parent=1 // pred_region
      %s487 = ssub.s32 128, 128
      %488 = vsyncadd [#allocation4], %s487
      %s490 = sshll.u32 [#allocation11], 4
      %s491 = int_to_ptr.vmem [resolvable:$true] %s490
      %493 = dma.vmem_to_hbm [thread:$0]  %s491, 128, %s9, [#allocation4]
    $region61: #{tpu_custom_call.1} parent=1 // pred_fallthru
      _
    // Predicated region
    $region62: #{tpu_custom_call.1} parent=1 // pred_check
      _
    $region63: #{tpu_custom_call.1} parent=1 // pred_check_branch
      %495 = sbr.rel (0) target = $region65
    $region64: #{tpu_custom_call.1} parent=1 // pred_region
      %s497 = ssub.s32 128, 128
      %498 = vsyncadd [#allocation13], %s497
      %s500 = sshll.u32 [#allocation12], 4
      %s501 = int_to_ptr.vmem [resolvable:$true] %s500
      %503 = dma.vmem_to_hbm [thread:$0]  %s501, 128, %s10, [#allocation13]
    $region65: #{tpu_custom_call.1} parent=1 // pred_fallthru
      _
    // Predicated region
    $region66: #{tpu_custom_call.1} parent=1 // pred_check
      _
    $region67: #{tpu_custom_call.1} parent=1 // pred_check_branch
      %505 = sbr.rel (0) target = $region69
    $region68: #{tpu_custom_call.1} parent=1 // pred_region
      %506 = dma.done [#allocation4], 128
    $region69: #{tpu_custom_call.1} parent=1 // pred_fallthru
      _
    // Predicated region
    $region70: #{tpu_custom_call.1} parent=1 // pred_check
      _
    $region71: #{tpu_custom_call.1} parent=1 // pred_check_branch
      %508 = sbr.rel (0) target = $region73
    $region72: #{tpu_custom_call.1} parent=1 // pred_region
      %509 = dma.done [#allocation13], 128
    $region73: #{tpu_custom_call.1} parent=1 // pred_fallthru
      _
    %510 = vsyncpa [#allocation3], 1
    %511 = vsyncpa [#allocation6], 1
    %512 = vsyncpa [#allocation9], 1
    %513 = vsyncpa [#allocation4], 1
    %514 = vsyncpa [#allocation13], 1

</llo_original>
